<compile_context>
chip_gen: v5e
topology: v5e:2x2
jax: 0.10.0
libtpu: 0.0.40
codegen_flags: <defaults>
</compile_context>

<pallas_src>
from functools import partial

import jax
import jax.numpy as jnp
from jax.experimental import pallas as pl
from jax.experimental.pallas import tpu as pltpu


def _round_up(v, mult):
    return ((v + mult - 1) // mult) * mult


# ---------------------------------------------------------------------------
# Kernel 1: fused MLP   h = relu(x @ W1t + b1) @ W2t + b2
#   x tiled over node rows; weights small enough to sit whole in VMEM.
# ---------------------------------------------------------------------------
def mlp_kernel(x_ref, w1t_ref, b1_ref, w2t_ref, b2_ref, h_ref):
    x = x_ref[...]                                            # bf16 (TM, m_pad)
    h1 = jnp.dot(x, w1t_ref[...], preferred_element_type=jnp.float32)
    h1 = jnp.maximum(h1 + b1_ref[...], 0.0)                   # bias+relu in f32
    h2 = jnp.dot(h1.astype(jnp.bfloat16), w2t_ref[...],
                 preferred_element_type=jnp.float32)
    h_ref[...] = h2 + b2_ref[...]                             # f32 output


def mlp_forward(x_pad, w1t, b1, w2t, b2, *, tm):
    n_pad, m_pad = x_pad.shape
    nhid_pad = w1t.shape[1]
    my_pad = w2t.shape[1]
    return pl.pallas_call(
        mlp_kernel,
        out_shape=jax.ShapeDtypeStruct((n_pad, my_pad), jnp.float32),
        grid=(n_pad // tm,),
        in_specs=[
            pl.BlockSpec((tm, m_pad), lambda i: (i, 0)),
            pl.BlockSpec((m_pad, nhid_pad), lambda i: (0, 0)),
            pl.BlockSpec((1, nhid_pad), lambda i: (0, 0)),
            pl.BlockSpec((nhid_pad, my_pad), lambda i: (0, 0)),
            pl.BlockSpec((1, my_pad), lambda i: (0, 0)),
        ],
        out_specs=pl.BlockSpec((tm, my_pad), lambda i: (i, 0)),
        compiler_params=pltpu.CompilerParams(
            dimension_semantics=("parallel",)),
    )(x_pad, w1t, b1, w2t, b2)


# ---------------------------------------------------------------------------
# Kernel 2: one APPNP hop   z_out = (1 - alpha) * (S @ z) + alpha * h
#   grid = (row tiles, reduction tiles); f32 accumulator scratch in VMEM.
# ---------------------------------------------------------------------------
def appnp_prop_kernel(alpha, s_ref, z_ref, h_ref, o_ref, acc_ref):
    k = pl.program_id(1)

    @pl.when(k == 0)
    def _():
        acc_ref[...] = jnp.zeros_like(acc_ref)

    acc_ref[...] += jnp.dot(s_ref[...], z_ref[...],
                            preferred_element_type=jnp.float32)

    @pl.when(k == pl.num_programs(1) - 1)
    def _():
        o_ref[...] = (1.0 - alpha) * acc_ref[...] + alpha * h_ref[...]


def appnp_prop_hop(s_bf16, z_bf16, h_f32, alpha, *, tm, tk):
    n_pad = s_bf16.shape[0]
    my_pad = z_bf16.shape[1]
    return pl.pallas_call(
        partial(appnp_prop_kernel, alpha),
        out_shape=jax.ShapeDtypeStruct((n_pad, my_pad), jnp.float32),
        grid=(n_pad // tm, n_pad // tk),
        in_specs=[
            pl.BlockSpec((tm, tk), lambda i, k: (i, k)),       # S tile (bf16)
            pl.BlockSpec((tk, my_pad), lambda i, k: (k, 0)),   # z tile (bf16)
            pl.BlockSpec((tm, my_pad), lambda i, k: (i, 0)),   # h tile (f32)
        ],
        out_specs=pl.BlockSpec((tm, my_pad), lambda i, k: (i, 0)),
        scratch_shapes=[pltpu.VMEM((tm, my_pad), jnp.float32)],
        compiler_params=pltpu.CompilerParams(
            dimension_semantics=("parallel", "arbitrary")),
    )(s_bf16, z_bf16, h_f32)


# ---------------------------------------------------------------------------
# Full APPNP_Net forward (eval mode)
# ---------------------------------------------------------------------------
def appnp_net_forward(x, edge_index, w1, b1, w2, b2, K, alpha):
    """x: (N, m) f32; edge_index: (2, E) i32; w1: (nhid, m); w2: (m_y, nhid)."""
    N, m = x.shape
    nhid = w1.shape[0]
    m_y = w2.shape[0]

    # ---- tile sizes: 128-aligned, 256 when N allows (v6e MXU geometry) ----
    tile = 256 if N >= 256 else 128
    n_pad = _round_up(N, tile)
    m_pad = _round_up(m, 128)
    nhid_pad = _round_up(nhid, 128)
    my_pad = _round_up(m_y, 128)
    tm = tk = tile

    # ---- glue: dense symmetric gcn_norm adjacency, emitted once in bf16 ---
    src, dst = edge_index[0], edge_index[1]
    A = jnp.zeros((N, N), jnp.float32).at[dst, src].add(1.0)
    A = A + jnp.eye(N, dtype=jnp.float32)                 # add self-loops
    deg = A.sum(axis=1)
    dis = jnp.where(deg > 0.0, 1.0 / jnp.sqrt(deg), 0.0)
    S = dis[:, None] * A * dis[None, :]
    S_pad = jnp.zeros((n_pad, n_pad), jnp.bfloat16).at[:N, :N].set(
        S.astype(jnp.bfloat16))

    # ---- zero-pad input / params to lane-dense shapes; bf16 MXU operands ---
    x_pad = jnp.zeros((n_pad, m_pad), jnp.bfloat16).at[:N, :m].set(
        x.astype(jnp.bfloat16))
    w1t = jnp.zeros((m_pad, nhid_pad), jnp.bfloat16).at[:m, :nhid].set(
        w1.T.astype(jnp.bfloat16))
    b1p = jnp.zeros((1, nhid_pad), jnp.float32).at[0, :nhid].set(b1)
    w2t = jnp.zeros((nhid_pad, my_pad), jnp.bfloat16).at[:nhid, :m_y].set(
        w2.T.astype(jnp.bfloat16))
    b2p = jnp.zeros((1, my_pad), jnp.float32).at[0, :m_y].set(b2)

    # ---- MLP first (dropout is identity in eval mode) ----------------------
    h = mlp_forward(x_pad, w1t, b1p, w2t, b2p, tm=tm)     # (n_pad, my_pad) f32

    # ---- APPNP propagation: K sequential hops -------------------------------
    z = h
    for _ in range(K):
        z = appnp_prop_hop(S_pad, z.astype(jnp.bfloat16), h, alpha,
                           tm=tm, tk=tk)

    return z[:N, :m_y]


if __name__ == "__main__":
    # Small deterministic example consistent with APPNP_Net(m, m_y, nhid, K, alpha).
    N, m, nhid, m_y, K, alpha = 16, 32, 64, 8, 3, 0.1

    key = jax.random.PRNGKey(0)
    kx, k1, k2, k3, k4 = jax.random.split(key, 5)

    x = jax.random.normal(kx, (N, m), dtype=jnp.float32)
    w1 = jax.random.normal(k1, (nhid, m), dtype=jnp.float32) / jnp.sqrt(m)
    b1 = jax.random.normal(k2, (nhid,), dtype=jnp.float32) * 0.01
    w2 = jax.random.normal(k3, (m_y, nhid), dtype=jnp.float32) / jnp.sqrt(nhid)
    b2 = jax.random.normal(k4, (m_y,), dtype=jnp.float32) * 0.01

    # symmetric ring graph as edge_index (2, E)
    fwd = jnp.stack([jnp.arange(N), (jnp.arange(N) + 1) % N], axis=0)
    bwd = jnp.stack([(jnp.arange(N) + 1) % N, jnp.arange(N)], axis=0)
    edge_index = jnp.concatenate([fwd, bwd], axis=1).astype(jnp.int32)

    out = appnp_net_forward(x, edge_index, w1, b1, w2, b2, K, alpha)
    out = jax.block_until_ready(out)

    # pure-JAX f32 reference of the same eval-mode forward
    A = jnp.zeros((N, N), jnp.float32).at[edge_index[1], edge_index[0]].add(1.0)
    A = A + jnp.eye(N, dtype=jnp.float32)
    d = A.sum(axis=1)
    dis = jnp.where(d > 0, 1.0 / jnp.sqrt(d), 0.0)
    S = dis[:, None] * A * dis[None, :]
    hr = jnp.maximum(x @ w1.T + b1[None, :], 0.0) @ w2.T + b2[None, :]
    zr = hr
    for _ in range(K):
        zr = (1.0 - alpha) * (S @ zr) + alpha * hr

    # bf16 MXU operands with f32 accumulation -> loose tolerance vs f32 ref
    assert jnp.allclose(out, zr, atol=5e-2, rtol=5e-2), "mismatch vs reference"

    print("KERNEL_OK")
</pallas_src>

<mosaic_0001>
module attributes {stable_mosaic.version = 11 : i64} {
  func.func @mlp_kernel(%arg0: i32, %arg1: memref<128x128xbf16, #tpu.memory_space<vmem>>, %arg2: memref<128x128xbf16, #tpu.memory_space<vmem>>, %arg3: memref<1x128xf32, #tpu.memory_space<vmem>>, %arg4: memref<128x128xbf16, #tpu.memory_space<vmem>>, %arg5: memref<1x128xf32, #tpu.memory_space<vmem>>, %arg6: memref<128x128xf32, #tpu.memory_space<vmem>>) attributes {dimension_semantics = [#tpu.dimension_semantics<parallel>], iteration_bounds = array<i64: 1>, scalar_prefetch = 0 : i64, scratch_operands = 0 : i64, tpu.core_type = #tpu.core_type<tc>, window_params = [{transform_indices = @transform_0, window_bounds = array<i64: 128, 128>}, {pipeline_mode = #tpu.pipeline_mode<synchronous>, transform_indices = @transform_1, window_bounds = array<i64: 128, 128>}, {pipeline_mode = #tpu.pipeline_mode<synchronous>, transform_indices = @transform_2, window_bounds = array<i64: 1, 128>}, {pipeline_mode = #tpu.pipeline_mode<synchronous>, transform_indices = @transform_3, window_bounds = array<i64: 128, 128>}, {pipeline_mode = #tpu.pipeline_mode<synchronous>, transform_indices = @transform_4, window_bounds = array<i64: 1, 128>}, {transform_indices = @transform_5, window_bounds = array<i64: 128, 128>}]} {
    %c0 = arith.constant 0 : index
    %c0_0 = arith.constant 0 : index
    %0 = vector.load %arg1[%c0, %c0_0] : memref<128x128xbf16, #tpu.memory_space<vmem>>, vector<128x128xbf16>
    %c0_1 = arith.constant 0 : index
    %c0_2 = arith.constant 0 : index
    %1 = vector.load %arg2[%c0_1, %c0_2] : memref<128x128xbf16, #tpu.memory_space<vmem>>, vector<128x128xbf16>
    %cst = arith.constant dense<0.000000e+00> : vector<128x128xf32>
    %2 = tpu.matmul %0, %1, %cst {dimension_numbers = #tpu.dot_dimension_numbers<[1], [0], [0], [1], [0, 0, 1, 1], [], []>} : vector<128x128xbf16>, vector<128x128xbf16>, vector<128x128xf32> -> vector<128x128xf32>
    %c0_3 = arith.constant 0 : index
    %c0_4 = arith.constant 0 : index
    %3 = vector.load %arg3[%c0_3, %c0_4] : memref<1x128xf32, #tpu.memory_space<vmem>>, vector<1x128xf32>
    %4 = vector.broadcast %3 : vector<1x128xf32> to vector<128x128xf32>
    %5 = arith.addf %2, %4 : vector<128x128xf32>
    %cst_5 = arith.constant 0.000000e+00 : f32
    %6 = vector.broadcast %cst_5 : f32 to vector<128x128xf32>
    %7 = arith.maximumf %5, %6 : vector<128x128xf32>
    %8 = arith.truncf %7 : vector<128x128xf32> to vector<128x128xbf16>
    %c0_6 = arith.constant 0 : index
    %c0_7 = arith.constant 0 : index
    %9 = vector.load %arg4[%c0_6, %c0_7] : memref<128x128xbf16, #tpu.memory_space<vmem>>, vector<128x128xbf16>
    %cst_8 = arith.constant dense<0.000000e+00> : vector<128x128xf32>
    %10 = tpu.matmul %8, %9, %cst_8 {dimension_numbers = #tpu.dot_dimension_numbers<[1], [0], [0], [1], [0, 0, 1, 1], [], []>} : vector<128x128xbf16>, vector<128x128xbf16>, vector<128x128xf32> -> vector<128x128xf32>
    %c0_9 = arith.constant 0 : index
    %c0_10 = arith.constant 0 : index
    %11 = vector.load %arg5[%c0_9, %c0_10] : memref<1x128xf32, #tpu.memory_space<vmem>>, vector<1x128xf32>
    %12 = vector.broadcast %11 : vector<1x128xf32> to vector<128x128xf32>
    %13 = arith.addf %10, %12 : vector<128x128xf32>
    %c0_11 = arith.constant 0 : index
    %c0_12 = arith.constant 0 : index
    %14 = vector.load %arg6[%c0_11, %c0_12] : memref<128x128xf32, #tpu.memory_space<vmem>>, vector<128x128xf32>
    tpu.vector_store %arg6[%c0_11, %c0_12], %13 {strides = array<i32>} : memref<128x128xf32, #tpu.memory_space<vmem>>, vector<128x128xf32>,
    return
  }
  func.func @transform_0(%arg0: i32) -> (i32, i32) {
    %c0_i32 = arith.constant 0 : i32
    %c0_i32_0 = arith.constant 0 : i32
    return %arg0, %c0_i32 : i32, i32
  }
  func.func @transform_1(%arg0: i32) -> (i32, i32) {
    %c0_i32 = arith.constant 0 : i32
    %c0_i32_0 = arith.constant 0 : i32
    %c0_i32_1 = arith.constant 0 : i32
    return %c0_i32, %c0_i32_0 : i32, i32
  }
  func.func @transform_2(%arg0: i32) -> (i32, i32) {
    %c0_i32 = arith.constant 0 : i32
    %c0_i32_0 = arith.constant 0 : i32
    %c0_i32_1 = arith.constant 0 : i32
    return %c0_i32, %c0_i32_0 : i32, i32
  }
  func.func @transform_3(%arg0: i32) -> (i32, i32) {
    %c0_i32 = arith.constant 0 : i32
    %c0_i32_0 = arith.constant 0 : i32
    %c0_i32_1 = arith.constant 0 : i32
    return %c0_i32, %c0_i32_0 : i32, i32
  }
  func.func @transform_4(%arg0: i32) -> (i32, i32) {
    %c0_i32 = arith.constant 0 : i32
    %c0_i32_0 = arith.constant 0 : i32
    %c0_i32_1 = arith.constant 0 : i32
    return %c0_i32, %c0_i32_0 : i32, i32
  }
  func.func @transform_5(%arg0: i32) -> (i32, i32) {
    %c0_i32 = arith.constant 0 : i32
    %c0_i32_0 = arith.constant 0 : i32
    return %arg0, %c0_i32 : i32, i32
  }
}

</mosaic_0001>

<llo_original>
// kernel: tpu_custom_call.1
$region0: #{tpu_custom_call.1}
  #allocation0 [shape = 'u32[]', space=smem, size = 0x4, offset = 0x4, fixed_abs, tag = 'smem constant byte address 0x4 - core index']
  #allocation1 [shape = 'u32[72,128]{1,0:T(1,128)}', space=vmem, size = 0x9000, scoped, tag = 'internal scratch']
  %s0 = inlined_call_operand.hbm [shape: bf16[128,128], index: 0, kind: input, shape index: {}]
  %s1 = inlined_call_operand.hbm [shape: bf16[128,128], index: 1, kind: input, shape index: {}]
  %s2 = inlined_call_operand.vmem [shape: f32[1,128], index: 2, kind: input, shape index: {}]
  %s3 = inlined_call_operand.hbm [shape: bf16[128,128], index: 3, kind: input, shape index: {}]
  %s4 = inlined_call_operand.vmem [shape: f32[1,128], index: 4, kind: input, shape index: {}]
  %s5 = inlined_call_operand.hbm [shape: f32[128,128], index: 5, kind: output, shape index: {}]
  %s6 = sld [smem:[#allocation0]]
  $region42: #{tpu_custom_call.1} parent=0
    _
  %s8 = ssub.s32 1, %s6
  %s9 = scalar_select 0, %s8, %s6
  $region1: #{tpu_custom_call.1} parent=0
    #allocation2 [shape = 'u8[32768]{0}', space=vmem, size = 0x8000, scoped, tag = 'input window, operand 0, single buffered']
    #allocation3 [shape = 's32[1]{0}', space=sflag, size = 0x4, scoped, tag = 'scoped memory for tpu_custom_call.1']
    #allocation4 [shape = 's32[1]{0}', space=sflag, size = 0x4, scoped, tag = 'scoped memory for tpu_custom_call.1']
    #allocation5 [shape = 'u8[32768]{0}', space=vmem, size = 0x8000, scoped, tag = 'input window, operand 1, single buffered']
    #allocation6 [shape = 's32[1]{0}', space=sflag, size = 0x4, scoped, tag = 'scoped memory for tpu_custom_call.1']
    #allocation7 [shape = 'u8[32768]{0}', space=vmem, size = 0x8000, scoped, tag = 'input window, operand 3, single buffered']
    #allocation8 [shape = 'u8[65536]{0}', space=vmem, size = 0x10000, scoped, tag = 'output window, operand 0, single buffered']
    %10 = vsyncpa [#allocation3], 0
    %11 = vsyncpa [#allocation6], 0
    %12 = vsyncpa [#allocation4], 0
    // Predicated region
    $region2: #{tpu_custom_call.1} parent=1 // pred_check
      _
    $region3: #{tpu_custom_call.1} parent=1 // pred_check_branch
      %14 = sbr.rel (0) target = $region5
    $region4: #{tpu_custom_call.1} parent=1 // pred_region
      %16 = vsyncadd [#allocation3], 0
      %s17 = sshll.u32 %s0, 4
      %s18 = int_to_ptr.hbm [resolvable:$true] %s17
      %s19 = sshll.u32 [#allocation2], 4
      %s20 = int_to_ptr.vmem [resolvable:$true] %s19
      %25 = dma.hbm_to_vmem [thread:$0]  %s18, 1024, %s20, [#allocation3], 64, 64, 4
    $region5: #{tpu_custom_call.1} parent=1 // pred_fallthru
      _
    // Predicated region
    $region6: #{tpu_custom_call.1} parent=1 // pred_check
      _
    $region7: #{tpu_custom_call.1} parent=1 // pred_check_branch
      %27 = sbr.rel (0) target = $region9
    $region8: #{tpu_custom_call.1} parent=1 // pred_region
      %29 = vsyncadd [#allocation6], 0
      %s30 = sshll.u32 %s1, 4
      %s31 = int_to_ptr.hbm [resolvable:$true] %s30
      %s32 = sshll.u32 [#allocation5], 4
      %s33 = int_to_ptr.vmem [resolvable:$true] %s32
      %38 = dma.hbm_to_vmem [thread:$0]  %s31, 1024, %s33, [#allocation6], 64, 64, 4
    $region9: #{tpu_custom_call.1} parent=1 // pred_fallthru
      _
    // Predicated region
    $region10: #{tpu_custom_call.1} parent=1 // pred_check
      _
    $region11: #{tpu_custom_call.1} parent=1 // pred_check_branch
      %40 = sbr.rel (0) target = $region13
    $region12: #{tpu_custom_call.1} parent=1 // pred_region
      _
    $region13: #{tpu_custom_call.1} parent=1 // pred_fallthru
      _
    // Predicated region
    $region14: #{tpu_custom_call.1} parent=1 // pred_check
      _
    $region15: #{tpu_custom_call.1} parent=1 // pred_check_branch
      %42 = sbr.rel (0) target = $region17
    $region16: #{tpu_custom_call.1} parent=1 // pred_region
      %44 = vsyncadd [#allocation6], 0
      %s45 = sshll.u32 %s3, 4
      %s46 = int_to_ptr.hbm [resolvable:$true] %s45
      %s47 = sshll.u32 [#allocation7], 4
      %s48 = int_to_ptr.vmem [resolvable:$true] %s47
      %53 = dma.hbm_to_vmem [thread:$0]  %s46, 1024, %s48, [#allocation6], 64, 64, 4
    $region17: #{tpu_custom_call.1} parent=1 // pred_fallthru
      _
    // Predicated region
    $region18: #{tpu_custom_call.1} parent=1 // pred_check
      _
    $region19: #{tpu_custom_call.1} parent=1 // pred_check_branch
      %55 = sbr.rel (0) target = $region21
    $region20: #{tpu_custom_call.1} parent=1 // pred_region
      _
    $region21: #{tpu_custom_call.1} parent=1 // pred_fallthru
      _
    // Predicated region
    $region22: #{tpu_custom_call.1} parent=1 // pred_check
      _
    $region23: #{tpu_custom_call.1} parent=1 // pred_check_branch
      %57 = sbr.rel (0) target = $region25
    $region24: #{tpu_custom_call.1} parent=1 // pred_region
      %59 = dma.done [#allocation3], 1024
    $region25: #{tpu_custom_call.1} parent=1 // pred_fallthru
      _
    // Predicated region
    $region26: #{tpu_custom_call.1} parent=1 // pred_check
      _
    $region27: #{tpu_custom_call.1} parent=1 // pred_check_branch
      %61 = sbr.rel (0) target = $region29
    $region28: #{tpu_custom_call.1} parent=1 // pred_region
      %63 = dma.done [#allocation6], 1024
    $region29: #{tpu_custom_call.1} parent=1 // pred_fallthru
      _
    // Predicated region
    $region30: #{tpu_custom_call.1} parent=1 // pred_check
      _
    $region31: #{tpu_custom_call.1} parent=1 // pred_check_branch
      %65 = sbr.rel (0) target = $region33
    $region32: #{tpu_custom_call.1} parent=1 // pred_region
      %67 = dma.done [#allocation6], 1024
    $region33: #{tpu_custom_call.1} parent=1 // pred_fallthru
      _
    %v68 = vld [vmem:[#allocation2] sm:$0xf]
    %v69 = vld [vmem:[#allocation2 + $0x4] sm:$0xf]
    %v70 = vld [vmem:[#allocation2 + $0x8] sm:$0xf]
    %v71 = vld [vmem:[#allocation2 + $0xc] sm:$0xf]
    %v72 = vld [vmem:[#allocation2 + $0x10] sm:$0xf]
    %v73 = vld [vmem:[#allocation2 + $0x14] sm:$0xf]
    %v74 = vld [vmem:[#allocation2 + $0x18] sm:$0xf]
    %v75 = vld [vmem:[#allocation2 + $0x1c] sm:$0xf]
    %v76 = vld [vmem:[#allocation2 + $0x20] sm:$0xf]
    %v77 = vld [vmem:[#allocation2 + $0x24] sm:$0xf]
    %v78 = vld [vmem:[#allocation2 + $0x28] sm:$0xf]
    %v79 = vld [vmem:[#allocation2 + $0x2c] sm:$0xf]
    %v80 = vld [vmem:[#allocation2 + $0x30] sm:$0xf]
    %v81 = vld [vmem:[#allocation2 + $0x34] sm:$0xf]
    %v82 = vld [vmem:[#allocation2 + $0x38] sm:$0xf]
    %v83 = vld [vmem:[#allocation2 + $0x3c] sm:$0xf]
    %v84 = vld [vmem:[#allocation5] sm:$0xf]
    %v85 = vld [vmem:[#allocation5 + $0x4] sm:$0xf]
    %v86 = vld [vmem:[#allocation5 + $0x8] sm:$0xf]
    %v87 = vld [vmem:[#allocation5 + $0xc] sm:$0xf]
    %v88 = vld [vmem:[#allocation5 + $0x10] sm:$0xf]
    %v89 = vld [vmem:[#allocation5 + $0x14] sm:$0xf]
    %v90 = vld [vmem:[#allocation5 + $0x18] sm:$0xf]
    %v91 = vld [vmem:[#allocation5 + $0x1c] sm:$0xf]
    %v92 = vld [vmem:[#allocation5 + $0x20] sm:$0xf]
    %v93 = vld [vmem:[#allocation5 + $0x24] sm:$0xf]
    %v94 = vld [vmem:[#allocation5 + $0x28] sm:$0xf]
    %v95 = vld [vmem:[#allocation5 + $0x2c] sm:$0xf]
    %v96 = vld [vmem:[#allocation5 + $0x30] sm:$0xf]
    %v97 = vld [vmem:[#allocation5 + $0x34] sm:$0xf]
    %v98 = vld [vmem:[#allocation5 + $0x38] sm:$0xf]
    %v99 = vld [vmem:[#allocation5 + $0x3c] sm:$0xf]
    %v100 = vld [vmem:[%s2] sm:$0x1]
    %v102 = vperm.slane %v100, 0
    %v120 = vunpack.c.l.b16 %v68
    %v121 = vunpack.c.l.b16 %v69
    %v122 = vunpack.c.l.b16 %v70
    %v123 = vunpack.c.l.b16 %v71
    %v124 = vunpack.c.l.b16 %v72
    %v125 = vunpack.c.l.b16 %v73
    %v126 = vunpack.c.l.b16 %v74
    %v127 = vunpack.c.l.b16 %v75
    %v128 = vunpack.c.l.b16 %v76
    %v129 = vunpack.c.l.b16 %v77
    %v130 = vunpack.c.l.b16 %v78
    %v131 = vunpack.c.l.b16 %v79
    %v132 = vunpack.c.l.b16 %v80
    %v133 = vunpack.c.l.b16 %v81
    %v134 = vunpack.c.l.b16 %v82
    %v135 = vunpack.c.l.b16 %v83
    %v136 = vpack.c.b16 %v121, %v120
    %v137 = vpack.c.b16 %v123, %v122
    %v138 = vpack.c.b16 %v125, %v124
    %v139 = vpack.c.b16 %v127, %v126
    %v140 = vpack.c.b16 %v129, %v128
    %v141 = vpack.c.b16 %v131, %v130
    %v142 = vpack.c.b16 %v133, %v132
    %v143 = vpack.c.b16 %v135, %v134
    %v168 = vunpack.c.l.b16 %v84
    %v169 = vunpack.c.l.b16 %v85
    %v170 = vunpack.c.l.b16 %v86
    %v171 = vunpack.c.l.b16 %v87
    %v172 = vunpack.c.l.b16 %v88
    %v173 = vunpack.c.l.b16 %v89
    %v174 = vunpack.c.l.b16 %v90
    %v175 = vunpack.c.l.b16 %v91
    %v176 = vunpack.c.l.b16 %v92
    %v177 = vunpack.c.l.b16 %v93
    %v178 = vunpack.c.l.b16 %v94
    %v179 = vunpack.c.l.b16 %v95
    %v180 = vunpack.c.l.b16 %v96
    %v181 = vunpack.c.l.b16 %v97
    %v182 = vunpack.c.l.b16 %v98
    %v183 = vunpack.c.l.b16 %v99
    %v184 = vpack.c.b16 %v169, %v168
    %v185 = vpack.c.b16 %v171, %v170
    %v186 = vpack.c.b16 %v173, %v172
    %v187 = vpack.c.b16 %v175, %v174
    %v188 = vpack.c.b16 %v177, %v176
    %v189 = vpack.c.b16 %v179, %v178
    %v190 = vpack.c.b16 %v181, %v180
    %v191 = vpack.c.b16 %v183, %v182
    %200 = vmatpush.bf16.msra.mxu0 %v191
    %201 = vmatpush.bf16.msra.mxu0 %v190
    %202 = vmatpush.bf16.msra.mxu0 %v189
    %203 = vmatpush.bf16.msra.mxu0 %v188
    %204 = vmatpush.bf16.msra.mxu0 %v187
    %205 = vmatpush.bf16.msra.mxu0 %v186
    %206 = vmatpush.bf16.msra.mxu0 %v185
    %207 = vmatpush.bf16.msra.mxu0 %v184
    %208 = vmatmul.bf16.gmra.mxu0 %v136
    %v209 = vpop.f32.mrf.mxu0
    %v210 = vadd.f32 %v102, %v209
    %v211 = vpop.f32.mrf.mxu0
    %v212 = vadd.f32 %v102, %v211
    %213 = vmatmul.bf16.gmra.mxu0 %v137
    %v214 = vpop.f32.mrf.mxu0
    %v215 = vadd.f32 %v102, %v214
    %v216 = vpop.f32.mrf.mxu0
    %v217 = vadd.f32 %v102, %v216
    %218 = vmatmul.bf16.gmra.mxu0 %v138
    %v219 = vpop.f32.mrf.mxu0
    %v220 = vadd.f32 %v102, %v219
    %v221 = vpop.f32.mrf.mxu0
    %v222 = vadd.f32 %v102, %v221
    %223 = vmatmul.bf16.gmra.mxu0 %v139
    %v224 = vpop.f32.mrf.mxu0
    %v225 = vadd.f32 %v102, %v224
    %v226 = vpop.f32.mrf.mxu0
    %v227 = vadd.f32 %v102, %v226
    %228 = vmatmul.bf16.gmra.mxu0 %v140
    %v229 = vpop.f32.mrf.mxu0
    %v230 = vadd.f32 %v102, %v229
    %v231 = vpop.f32.mrf.mxu0
    %v232 = vadd.f32 %v102, %v231
    %233 = vmatmul.bf16.gmra.mxu0 %v141
    %v234 = vpop.f32.mrf.mxu0
    %v235 = vadd.f32 %v102, %v234
    %v236 = vpop.f32.mrf.mxu0
    %v237 = vadd.f32 %v102, %v236
    %238 = vmatmul.bf16.gmra.mxu0 %v142
    %v239 = vpop.f32.mrf.mxu0
    %v240 = vadd.f32 %v102, %v239
    %v241 = vpop.f32.mrf.mxu0
    %v242 = vadd.f32 %v102, %v241
    %243 = vmatmul.bf16.gmra.mxu0 %v143
    %v244 = vpop.f32.mrf.mxu0
    %v245 = vadd.f32 %v102, %v244
    %v246 = vpop.f32.mrf.mxu0
    %v247 = vadd.f32 %v102, %v246
    %248 = vdwg.mxu0
    %v249 = vmax.f32 %v210, 0.0
    %v250 = vmax.f32 %v212, 0.0
    %v251 = vmax.f32 %v215, 0.0
    %v252 = vmax.f32 %v217, 0.0
    %v253 = vmax.f32 %v220, 0.0
    %v254 = vmax.f32 %v222, 0.0
    %v255 = vmax.f32 %v225, 0.0
    %v256 = vmax.f32 %v227, 0.0
    %v257 = vmax.f32 %v230, 0.0
    %v258 = vmax.f32 %v232, 0.0
    %v259 = vmax.f32 %v235, 0.0
    %v260 = vmax.f32 %v237, 0.0
    %v261 = vmax.f32 %v240, 0.0
    %v262 = vmax.f32 %v242, 0.0
    %v263 = vmax.f32 %v245, 0.0
    %v264 = vmax.f32 %v247, 0.0
    %v265 = vpack.c.bf16 %v250, %v249
    %v266 = vpack.c.bf16 %v252, %v251
    %v267 = vpack.c.bf16 %v254, %v253
    %v268 = vpack.c.bf16 %v256, %v255
    %v269 = vpack.c.bf16 %v258, %v257
    %v270 = vpack.c.bf16 %v260, %v259
    %v271 = vpack.c.bf16 %v262, %v261
    %v272 = vpack.c.bf16 %v264, %v263
    %v273 = vld [vmem:[#allocation7] sm:$0xf]
    %v274 = vld [vmem:[#allocation7 + $0x4] sm:$0xf]
    %v275 = vld [vmem:[#allocation7 + $0x8] sm:$0xf]
    %v276 = vld [vmem:[#allocation7 + $0xc] sm:$0xf]
    %v277 = vld [vmem:[#allocation7 + $0x10] sm:$0xf]
    %v278 = vld [vmem:[#allocation7 + $0x14] sm:$0xf]
    %v279 = vld [vmem:[#allocation7 + $0x18] sm:$0xf]
    %v280 = vld [vmem:[#allocation7 + $0x1c] sm:$0xf]
    %v281 = vld [vmem:[#allocation7 + $0x20] sm:$0xf]
    %v282 = vld [vmem:[#allocation7 + $0x24] sm:$0xf]
    %v283 = vld [vmem:[#allocation7 + $0x28] sm:$0xf]
    %v284 = vld [vmem:[#allocation7 + $0x2c] sm:$0xf]
    %v285 = vld [vmem:[#allocation7 + $0x30] sm:$0xf]
    %v286 = vld [vmem:[#allocation7 + $0x34] sm:$0xf]
    %v287 = vld [vmem:[#allocation7 + $0x38] sm:$0xf]
    %v288 = vld [vmem:[#allocation7 + $0x3c] sm:$0xf]
    %v289 = vld [vmem:[%s4] sm:$0x1]
    %v291 = vperm.slane %v289, 0
    %v309 = vunpack.c.l.b16 %v273
    %v310 = vunpack.c.l.b16 %v274
    %v311 = vunpack.c.l.b16 %v275
    %v312 = vunpack.c.l.b16 %v276
    %v313 = vunpack.c.l.b16 %v277
    %v314 = vunpack.c.l.b16 %v278
    %v315 = vunpack.c.l.b16 %v279
    %v316 = vunpack.c.l.b16 %v280
    %v317 = vunpack.c.l.b16 %v281
    %v318 = vunpack.c.l.b16 %v282
    %v319 = vunpack.c.l.b16 %v283
    %v320 = vunpack.c.l.b16 %v284
    %v321 = vunpack.c.l.b16 %v285
    %v322 = vunpack.c.l.b16 %v286
    %v323 = vunpack.c.l.b16 %v287
    %v324 = vunpack.c.l.b16 %v288
    %v325 = vpack.c.b16 %v310, %v309
    %v326 = vpack.c.b16 %v312, %v311
    %v327 = vpack.c.b16 %v314, %v313
    %v328 = vpack.c.b16 %v316, %v315
    %v329 = vpack.c.b16 %v318, %v317
    %v330 = vpack.c.b16 %v320, %v319
    %v331 = vpack.c.b16 %v322, %v321
    %v332 = vpack.c.b16 %v324, %v323
    %341 = vmatpush.bf16.msra.mxu0 %v332
    %342 = vmatpush.bf16.msra.mxu0 %v331
    %343 = vmatpush.bf16.msra.mxu0 %v330
    %344 = vmatpush.bf16.msra.mxu0 %v329
    %345 = vmatpush.bf16.msra.mxu0 %v328
    %346 = vmatpush.bf16.msra.mxu0 %v327
    %347 = vmatpush.bf16.msra.mxu0 %v326
    %348 = vmatpush.bf16.msra.mxu0 %v325
    %349 = vmatmul.bf16.gmra.mxu0 %v265
    %v350 = vpop.f32.mrf.mxu0
    %v351 = vadd.f32 %v291, %v350
    %v352 = vpop.f32.mrf.mxu0
    %v353 = vadd.f32 %v291, %v352
    %354 = vmatmul.bf16.gmra.mxu0 %v266
    %v355 = vpop.f32.mrf.mxu0
    %v356 = vadd.f32 %v291, %v355
    %v357 = vpop.f32.mrf.mxu0
    %v358 = vadd.f32 %v291, %v357
    %359 = vmatmul.bf16.gmra.mxu0 %v267
    %v360 = vpop.f32.mrf.mxu0
    %v361 = vadd.f32 %v291, %v360
    %v362 = vpop.f32.mrf.mxu0
    %v363 = vadd.f32 %v291, %v362
    %364 = vmatmul.bf16.gmra.mxu0 %v268
    %v365 = vpop.f32.mrf.mxu0
    %v366 = vadd.f32 %v291, %v365
    %v367 = vpop.f32.mrf.mxu0
    %v368 = vadd.f32 %v291, %v367
    %369 = vmatmul.bf16.gmra.mxu0 %v269
    %v370 = vpop.f32.mrf.mxu0
    %v371 = vadd.f32 %v291, %v370
    %v372 = vpop.f32.mrf.mxu0
    %v373 = vadd.f32 %v291, %v372
    %374 = vmatmul.bf16.gmra.mxu0 %v270
    %v375 = vpop.f32.mrf.mxu0
    %v376 = vadd.f32 %v291, %v375
    %v377 = vpop.f32.mrf.mxu0
    %v378 = vadd.f32 %v291, %v377
    %379 = vmatmul.bf16.gmra.mxu0 %v271
    %v380 = vpop.f32.mrf.mxu0
    %v381 = vadd.f32 %v291, %v380
    %v382 = vpop.f32.mrf.mxu0
    %v383 = vadd.f32 %v291, %v382
    %384 = vmatmul.bf16.gmra.mxu0 %v272
    %v385 = vpop.f32.mrf.mxu0
    %v386 = vadd.f32 %v291, %v385
    %v387 = vpop.f32.mrf.mxu0
    %v388 = vadd.f32 %v291, %v387
    %389 = vdwg.mxu0
    %390 = vst [vmem:[#allocation8] sm:$0xff] %v351
    %391 = vst [vmem:[#allocation8 + $0x8] sm:$0xff] %v353
    %392 = vst [vmem:[#allocation8 + $0x10] sm:$0xff] %v356
    %393 = vst [vmem:[#allocation8 + $0x18] sm:$0xff] %v358
    %394 = vst [vmem:[#allocation8 + $0x20] sm:$0xff] %v361
    %395 = vst [vmem:[#allocation8 + $0x28] sm:$0xff] %v363
    %396 = vst [vmem:[#allocation8 + $0x30] sm:$0xff] %v366
    %397 = vst [vmem:[#allocation8 + $0x38] sm:$0xff] %v368
    %398 = vst [vmem:[#allocation8 + $0x40] sm:$0xff] %v371
    %399 = vst [vmem:[#allocation8 + $0x48] sm:$0xff] %v373
    %400 = vst [vmem:[#allocation8 + $0x50] sm:$0xff] %v376
    %401 = vst [vmem:[#allocation8 + $0x58] sm:$0xff] %v378
    %402 = vst [vmem:[#allocation8 + $0x60] sm:$0xff] %v381
    %403 = vst [vmem:[#allocation8 + $0x68] sm:$0xff] %v383
    %404 = vst [vmem:[#allocation8 + $0x70] sm:$0xff] %v386
    %405 = vst [vmem:[#allocation8 + $0x78] sm:$0xff] %v388
    // Predicated region
    $region34: #{tpu_custom_call.1} parent=1 // pred_check
      _
    $region35: #{tpu_custom_call.1} parent=1 // pred_check_branch
      %407 = sbr.rel (0) target = $region37
    $region36: #{tpu_custom_call.1} parent=1 // pred_region
      %409 = vsyncadd [#allocation4], 0
      %s410 = sshll.u32 [#allocation8], 4
      %s411 = int_to_ptr.vmem [resolvable:$true] %s410
      %s412 = sshll.u32 %s5, 4
      %s413 = int_to_ptr.hbm [resolvable:$true] %s412
      %418 = dma.vmem_to_hbm [thread:$0]  %s411, 2048, %s413, [#allocation4], 128, 128, 8
    $region37: #{tpu_custom_call.1} parent=1 // pred_fallthru
      _
    // Predicated region
    $region38: #{tpu_custom_call.1} parent=1 // pred_check
      _
    $region39: #{tpu_custom_call.1} parent=1 // pred_check_branch
      %420 = sbr.rel (0) target = $region41
    $region40: #{tpu_custom_call.1} parent=1 // pred_region
      %422 = dma.done [#allocation4], 2048
    $region41: #{tpu_custom_call.1} parent=1 // pred_fallthru
      _
    %423 = vsyncpa [#allocation3], 1
    %424 = vsyncpa [#allocation6], 1
    %425 = vsyncpa [#allocation4], 1

</llo_original>
